<compile_context>
chip_gen: v7x
topology: tpu7x:2x2x1
jax: 0.10.0
libtpu: 0.0.40
codegen_flags: <defaults>
</compile_context>

<pallas_src>
import jax
import jax.numpy as jnp
from jax.experimental import pallas as pl
from jax.experimental.pallas import tpu as pltpu

K = 7            # conv kernel size
PAD = K // 2     # 'same' padding


# ---------------------------------------------------------------------------
# Pass A: channel mean / max, lane-dense over flattened H*W.
# ---------------------------------------------------------------------------
def pool_kernel(x_ref, p_ref):
    # x_ref: VMEM (1, C, T) input dtype; p_ref: VMEM (1, 2, T) f32.
    # Single load of the block into a value; both reductions consume it
    # (fused pass over C), accumulation in f32.
    x = x_ref[0].astype(jnp.float32)                              # (C, T)
    s = jnp.sum(x, axis=0, keepdims=True) * (1.0 / x.shape[0])    # (1, T)
    m = jnp.max(x, axis=0, keepdims=True)                         # (1, T)
    p_ref[0] = jnp.concatenate([s, m], axis=0)                    # (2, T)


# ---------------------------------------------------------------------------
# Pass B: 7x7 conv over [avg | max] + sigmoid, per batch element (tiny data).
# ---------------------------------------------------------------------------
def conv_sigmoid_kernel(w_ref, p_ref, y_ref):
    # w_ref: SMEM (2*K*K,) f32  -- conv weights, [avg-channel | max-channel]
    # p_ref: VMEM (1, 2, H, W) f32 ; y_ref: VMEM (1, 1, H, W) f32
    pooled = p_ref[0]                                  # (2, H, W)
    avg = pooled[0]
    mx = pooled[1]
    H, W = avg.shape

    def pad2d(a):                                      # zero pad by PAD each side
        zr = jnp.zeros((PAD, W), jnp.float32)
        a = jnp.concatenate([zr, a, zr], axis=0)       # (H + 2*PAD, W)
        zc = jnp.zeros((H + 2 * PAD, PAD), jnp.float32)
        return jnp.concatenate([zc, a, zc], axis=1)    # (H + 2*PAD, W + 2*PAD)

    avg_p = pad2d(avg)
    max_p = pad2d(mx)

    # Fully unrolled 7x7 conv on the VPU (keep off the MXU: 2 input channels,
    # 1 output channel).  The lane (dw) shift is hoisted out of the inner loop
    # (7 lane-offset slices per map instead of 49), the remaining inner slices
    # are cheap sublane (row) offsets, and four independent accumulators break
    # the serial add chain so the VLIW packer can fill the 4 VALU slots.
    accs = [jnp.zeros((H, W), jnp.float32) for _ in range(4)]
    for dw in range(K):
        a_sh = avg_p[:, dw:dw + W]                     # (H + 2*PAD, W)
        m_sh = max_p[:, dw:dw + W]
        for dh in range(K):
            w_a = w_ref[0 * K * K + dh * K + dw]
            w_m = w_ref[1 * K * K + dh * K + dw]
            i = (dw * K + dh) % 4
            accs[i] = accs[i] + w_a * a_sh[dh:dh + H, :] + w_m * m_sh[dh:dh + H, :]
    acc = (accs[0] + accs[1]) + (accs[2] + accs[3])
    y_ref[0, 0] = jax.nn.sigmoid(acc)


# ---------------------------------------------------------------------------
# Pass C: elementwise x * y, lane-dense over flattened H*W.
# ---------------------------------------------------------------------------
def mul_kernel(x_ref, y_ref, o_ref):
    # x_ref: (1, C, T); y_ref: (1, 1, T) f32; o_ref: (1, C, T)
    y = y_ref[0].astype(o_ref.dtype)                   # cast y down once
    o_ref[0] = x_ref[0] * y                            # broadcast over C, x dtype


# ---------------------------------------------------------------------------
# Wrapper
# ---------------------------------------------------------------------------
def _pick_hw_tile(hw, c, itemsize, budget_bytes=8 << 20):
    """Largest lane-dense (multiple-of-128) divisor of hw whose double-buffered
    in+out blocks of the multiply pass (~4 * c * t * itemsize bytes) stay under
    `budget_bytes` (safe for v7x's 64 MiB VMEM and v5e's 16 MiB scoped default).
    Falls back to the full extent when hw is not a multiple of 128 (legal)."""
    if hw % 128 != 0:
        return hw
    divisors = [t for t in range(128, hw + 1, 128) if hw % t == 0]
    fitting = [t for t in divisors if 4 * c * t * itemsize <= budget_bytes]
    return max(fitting) if fitting else min(divisors)


def sa_layer(x, conv_weight):
    """x: (B, C, H, W); conv_weight: (1, 2, K, K) f32 (PyTorch OIHW)."""
    B, C, H, W = x.shape
    HW = H * W
    w_flat = conv_weight.reshape(-1).astype(jnp.float32)          # (2*K*K,)

    T = _pick_hw_tile(HW, C, x.dtype.itemsize)
    n_hw = HW // T
    x3 = x.reshape(B, C, HW)

    # Pass A: channel mean / max  ->  pooled (B, 2, H*W) f32.
    pooled = pl.pallas_call(
        pool_kernel,
        out_shape=jax.ShapeDtypeStruct((B, 2, HW), jnp.float32),
        grid=(B, n_hw),
        in_specs=[pl.BlockSpec((1, C, T), lambda b, j: (b, 0, j))],
        out_specs=pl.BlockSpec((1, 2, T), lambda b, j: (b, 0, j)),
        compiler_params=pltpu.CompilerParams(
            dimension_semantics=("parallel", "parallel")),
    )(x3)

    # Pass B: 7x7 conv + sigmoid  ->  attention map y (B, 1, H, W) f32.
    y = pl.pallas_call(
        conv_sigmoid_kernel,
        out_shape=jax.ShapeDtypeStruct((B, 1, H, W), jnp.float32),
        grid=(B,),
        in_specs=[
            pl.BlockSpec(memory_space=pltpu.MemorySpace.SMEM),        # weights
            pl.BlockSpec((1, 2, H, W), lambda b: (b, 0, 0, 0)),       # pooled
        ],
        out_specs=pl.BlockSpec((1, 1, H, W), lambda b: (b, 0, 0, 0)),
        compiler_params=pltpu.CompilerParams(
            dimension_semantics=("parallel",)),
    )(w_flat, pooled.reshape(B, 2, H, W))

    # Pass C: elementwise x * y, lane-dense.
    out = pl.pallas_call(
        mul_kernel,
        out_shape=jax.ShapeDtypeStruct((B, C, HW), x.dtype),
        grid=(B, n_hw),
        in_specs=[
            pl.BlockSpec((1, C, T), lambda b, j: (b, 0, j)),          # x
            pl.BlockSpec((1, 1, T), lambda b, j: (b, 0, j)),          # y
        ],
        out_specs=pl.BlockSpec((1, C, T), lambda b, j: (b, 0, j)),
        compiler_params=pltpu.CompilerParams(
            dimension_semantics=("parallel", "parallel")),
    )(x3, y.reshape(B, 1, HW))

    return out.reshape(B, C, H, W)


def sa_layer_ref(x, conv_weight):
    """Plain-JAX reference matching the PyTorch forward exactly."""
    avg = jnp.mean(x, axis=1, keepdims=True)
    mx = jnp.max(x, axis=1, keepdims=True)
    y = jnp.concatenate([avg, mx], axis=1)
    y = jax.lax.conv_general_dilated(
        y, conv_weight, window_strides=(1, 1), padding="SAME",
        dimension_numbers=("NCHW", "OIHW", "NCHW"))
    y = jax.nn.sigmoid(y)
    return x * y


if __name__ == "__main__":
    key = jax.random.PRNGKey(0)
    kx, kw = jax.random.split(key)

    B, C, H, W = 2, 4, 16, 16
    x = jax.random.normal(kx, (B, C, H, W), dtype=jnp.float32)

    # Deterministic init, same fan-in bound style as nn.Conv2d default.
    fan_in = 2 * K * K
    bound = 1.0 / (fan_in ** 0.5)
    conv_weight = jax.random.uniform(
        kw, (1, 2, K, K), jnp.float32, minval=-bound, maxval=bound)

    out = jax.block_until_ready(sa_layer(x, conv_weight))

    ref = sa_layer_ref(x, conv_weight)
    assert out.shape == (B, C, H, W) and out.dtype == x.dtype
    assert jnp.allclose(out, ref, atol=1e-5, rtol=1e-5), float(
        jnp.max(jnp.abs(out - ref)))

    print("KERNEL_OK")
</pallas_src>

<mosaic_0001>
module attributes {stable_mosaic.version = 11 : i64} {
  func.func @pool_kernel(%arg0: i32, %arg1: i32, %arg2: memref<1x4x256xf32, #tpu.memory_space<vmem>>, %arg3: memref<1x2x256xf32, #tpu.memory_space<vmem>>) attributes {dimension_semantics = [#tpu.dimension_semantics<parallel>, #tpu.dimension_semantics<parallel>], iteration_bounds = array<i64: 2, 1>, scalar_prefetch = 0 : i64, scratch_operands = 0 : i64, tpu.core_type = #tpu.core_type<tc>, window_params = [{transform_indices = @transform_0, window_bounds = array<i64: 1, 4, 256>}, {transform_indices = @transform_1, window_bounds = array<i64: 1, 2, 256>}]} {
    %c0 = arith.constant 0 : index
    %c0_0 = arith.constant 0 : index
    %c0_1 = arith.constant 0 : index
    %0 = vector.load %arg2[%c0, %c0_0, %c0_1] : memref<1x4x256xf32, #tpu.memory_space<vmem>>, vector<1x4x256xf32>
    %1 = vector.shape_cast %0 : vector<1x4x256xf32> to vector<4x256xf32>
    %cst = arith.constant dense<0.000000e+00> : vector<256xf32>
    %2 = vector.multi_reduction <add>, %1, %cst [0] : vector<4x256xf32> to vector<256xf32>
    %3 = vector.shape_cast %2 : vector<256xf32> to vector<1x256xf32>
    %cst_2 = arith.constant 2.500000e-01 : f32
    %4 = vector.broadcast %cst_2 : f32 to vector<1x256xf32>
    %5 = arith.mulf %3, %4 : vector<1x256xf32>
    %cst_3 = arith.constant dense<0xFF800000> : vector<256xf32>
    %6 = vector.multi_reduction <maximumf>, %1, %cst_3 [0] : vector<4x256xf32> to vector<256xf32>
    %7 = vector.shape_cast %6 : vector<256xf32> to vector<1x256xf32>
    %8 = tpu.concatenate %5, %7 in 0 : vector<1x256xf32>, vector<1x256xf32> -> vector<2x256xf32>
    %c0_4 = arith.constant 0 : index
    %c0_5 = arith.constant 0 : index
    %c0_6 = arith.constant 0 : index
    %9 = vector.load %arg3[%c0_4, %c0_5, %c0_6] : memref<1x2x256xf32, #tpu.memory_space<vmem>>, vector<1x2x256xf32>
    %10 = vector.shape_cast %9 : vector<1x2x256xf32> to vector<2x256xf32>
    %11 = vector.shape_cast %8 : vector<2x256xf32> to vector<1x2x256xf32>
    tpu.vector_store %arg3[%c0_4, %c0_5, %c0_6], %11 {strides = array<i32>} : memref<1x2x256xf32, #tpu.memory_space<vmem>>, vector<1x2x256xf32>,
    return
  }
  func.func @transform_0(%arg0: i32, %arg1: i32) -> (i32, i32, i32) {
    %c0_i32 = arith.constant 0 : i32
    %c0_i32_0 = arith.constant 0 : i32
    return %arg0, %c0_i32, %arg1 : i32, i32, i32
  }
  func.func @transform_1(%arg0: i32, %arg1: i32) -> (i32, i32, i32) {
    %c0_i32 = arith.constant 0 : i32
    %c0_i32_0 = arith.constant 0 : i32
    return %arg0, %c0_i32, %arg1 : i32, i32, i32
  }
}

</mosaic_0001>

<llo_original>
// kernel: tpu_custom_call.1
$region0: #{tpu_custom_call.1}
  #allocation0 [shape = 'u32[]', space=smem, size = 0x4, offset = 0x4, fixed_abs, tag = 'smem constant byte address 0x4 - core index']
  #allocation1 [shape = 'u32[144,128]{1,0:T(1,128)}', space=vmem, size = 0x12000, scoped, tag = 'internal scratch']
  %s0 = inlined_call_operand.hbm [shape: f32[2,4,256], index: 0, kind: input, shape index: {}]
  %s1 = inlined_call_operand.hbm [shape: f32[2,2,256], index: 1, kind: output, shape index: {}]
  %s2 = sld [smem:[#allocation0]]
  $region41: #{tpu_custom_call.1} parent=0
    _
  %s4 = ssub.s32 1, %s2
  %s5 = scalar_select 0, %s4, %s2
  $region1: #{tpu_custom_call.1} parent=0
    #allocation2 [shape = 'u8[8192]{0}', space=vmem, size = 0x2000, scoped, tag = 'input window, operand 0']
    #allocation3 [shape = 's32[2]{0}', space=sflag, size = 0x8, scoped, tag = 'scoped memory for tpu_custom_call.1']
    #allocation4 [shape = 's32[2]{0}', space=sflag, size = 0x8, scoped, tag = 'scoped memory for tpu_custom_call.1']
    #allocation5 [shape = 'u8[4096]{0}', space=vmem, size = 0x1000, scoped, tag = 'output window, operand 0']
    %6 = vsyncpa [#allocation3], 0
    %s7 = scalar_lea.sflag [#allocation3], 1
    %8 = vsyncpa %s7, 0
    %9 = vsyncpa [#allocation4], 0
    %s10 = scalar_lea.sflag [#allocation4], 1
    %11 = vsyncpa %s10, 0
    loop: start=0, step=1, limit=4
    $region2: #{tpu_custom_call.1} parent=1 // loop_pre_header
      _
    $region3: #{tpu_custom_call.1} parent=1 // loop_header
      %s13 = sphi 0, %s17
      %p14 = scmp.ge.s32.totalorder %s13, 4
      %s20 = sphi 0, %s32
      %s21 = sphi 0, %s28
      %s22 = sphi 0, %s20
      %s23 = sphi 0, %s21
      %s24 = sphi 0, %s22
      %s25 = sphi 0, %s23
      %s37 = sphi 0, %s39
      %s40 = sphi 0, %s37
      %s41 = sphi 0, %s40
      %s57 = sphi 0, %s41
      %s65 = sphi 0, %s67
      %s68 = sphi 0, %s65
      %s69 = sphi 0, %s68
      %s85 = sphi 0, %s69
    $region4: #{tpu_custom_call.1} parent=1 // loop_header_branch
      %16 = sbr.rel (%p14) target = $region8
    $region5: #{tpu_custom_call.1} parent=1 // loop_body
      %s18 = ssub.s32 %s13, 1
      %s19 = ssub.s32 %s13, 2
      %s26 = sadd.s32 1, %s21
      %p27 = scmp.ge.s32.totalorder %s26, 1
      %s28 = scalar_select %p27, 0, %s26
      %s29 = sadd.s32 1, %s20
      %s30 = scalar_select %p27, %s29, %s20
      %p31 = scmp.ge.s32.totalorder %s30, 2
      %s32 = scalar_select %p31, 0, %s30
      %s33 = ssub.s32 %s20, %s32
      %s34 = ssub.s32 %s21, %s28
      %s35 = sor.u32 %s33, %s34
      %p36 = scmp.eq.s32.totalorder %s35, 0
      %s38 = sadd.s32 %s37, 1
      %s39 = scalar_select %p36, %s37, %s38
      %p42 = pneg %p36
      %p43 = scmp.eq.s32.totalorder %s13, 1
      %p44 = por %p42, %p43
      %p45 = scmp.ne.s32.totalorder %s37, %s40
      %p46 = scmp.eq.s32.totalorder %s13, 0
      %p47 = por %p45, %p46
      %p48 = scmp.ne.s32.totalorder %s37, %s40
      %p49 = scmp.eq.s32.totalorder %s18, 1
      %p50 = por %p48, %p49
      %p51 = scmp.ne.s32.totalorder %s40, %s41
      %p52 = scmp.eq.s32.totalorder %s18, 0
      %p53 = por %p51, %p52
      %p54 = scmp.ne.s32.totalorder %s40, %s41
      %p55 = scmp.eq.s32.totalorder %s19, 1
      %p56 = por %p54, %p55
      %p58 = scmp.ne.s32.totalorder %s41, %s57
      %p59 = scmp.eq.s32.totalorder %s19, 0
      %p60 = por %p58, %p59
      %s61 = ssub.s32 %s20, %s32
      %s62 = ssub.s32 %s21, %s28
      %s63 = sor.u32 %s61, %s62
      %p64 = scmp.eq.s32.totalorder %s63, 0
      %s66 = sadd.s32 %s65, 1
      %s67 = scalar_select %p64, %s65, %s66
      %p70 = pneg %p64
      %p71 = scmp.eq.s32.totalorder %s13, 1
      %p72 = por %p70, %p71
      %p73 = scmp.ne.s32.totalorder %s65, %s68
      %p74 = scmp.eq.s32.totalorder %s13, 0
      %p75 = por %p73, %p74
      %p76 = scmp.ne.s32.totalorder %s65, %s68
      %p77 = scmp.eq.s32.totalorder %s18, 1
      %p78 = por %p76, %p77
      %p79 = scmp.ne.s32.totalorder %s68, %s69
      %p80 = scmp.eq.s32.totalorder %s18, 0
      %p81 = por %p79, %p80
      %p82 = scmp.ne.s32.totalorder %s68, %s69
      %p83 = scmp.eq.s32.totalorder %s19, 1
      %p84 = por %p82, %p83
      %p86 = scmp.ne.s32.totalorder %s69, %s85
      %p87 = scmp.eq.s32.totalorder %s19, 0
      %p88 = por %p86, %p87
      %p89 = scmp.le.s32.totalorder 1, %s13
      %p90 = scmp.lt.s32.totalorder %s13, 3
      %p91 = pnand %p89, %p90
      %p92 = pneg %p91
      // Predicated region
      $region9: #{tpu_custom_call.1} parent=5 // pred_check
        _
      $region10: #{tpu_custom_call.1} parent=5 // pred_check_branch
        %94 = sbr.rel (%p91) target = $region12
      $region11: #{tpu_custom_call.1} parent=5 // pred_region
        %s95 = ssub.s32 %s13, 1
      $region12: #{tpu_custom_call.1} parent=5 // pred_fallthru
        _
      %p96 = scmp.lt.s32.totalorder %s13, 2
      // Predicated region
      $region13: #{tpu_custom_call.1} parent=5 // pred_check
        %p97 = pneg %p96
      $region14: #{tpu_custom_call.1} parent=5 // pred_check_branch
        %99 = sbr.rel (%p97) target = $region16
      $region15: #{tpu_custom_call.1} parent=5 // pred_region
        // Predicated region
        $region17: #{tpu_custom_call.1} parent=15 // pred_check
          %p100 = pneg %p47
        $region18: #{tpu_custom_call.1} parent=15 // pred_check_branch
          %102 = sbr.rel (%p100) target = $region20
        $region19: #{tpu_custom_call.1} parent=15 // pred_region
          %s103 = sand.u32 %s37, 1
          %s104 = scalar_lea.sflag [#allocation3], %s103
          %s105 = sand.u32 %s37, 1
          %s106 = smul.addr %s105, 8
          %s107 = scalar_lea.vmem [#allocation2], %s106
          %s108 = smul.u32 2, %s21
          %s110 = ssub.s32 128, 128
          %111 = vsyncadd %s104, %s110
          %s112 = smul.addr %s20, 2
          %s113 = sadd.s32 %s108, %s112
          %s114 = smul.addr %s113, 64
          %s115 = scalar_lea.hbm %s0, %s114
          %s117 = sshll.u32 %s107, 4
          %s118 = int_to_ptr.vmem [resolvable:$true] %s117
          %120 = dma.hbm_to_vmem [thread:$0]  %s115, 128, %s118, %s104
        $region20: #{tpu_custom_call.1} parent=15 // pred_fallthru
          _
      $region16: #{tpu_custom_call.1} parent=5 // pred_fallthru
        _
      %p121 = scmp.le.s32.totalorder 1, %s13
      %p122 = scmp.lt.s32.totalorder %s13, 3
      %p123 = pnand %p121, %p122
      %p124 = pneg %p123
      // Predicated region
      $region21: #{tpu_custom_call.1} parent=5 // pred_check
        _
      $region22: #{tpu_custom_call.1} parent=5 // pred_check_branch
        %126 = sbr.rel (%p123) target = $region24
      $region23: #{tpu_custom_call.1} parent=5 // pred_region
        %s127 = ssub.s32 %s13, 1
        %s128 = sand.u32 %s40, 1
        %s129 = scalar_lea.sflag [#allocation3], %s128
        %s130 = sand.u32 %s40, 1
        %s131 = smul.addr %s130, 8
        %s132 = scalar_lea.vmem [#allocation2], %s131
        // Predicated region
        $region25: #{tpu_custom_call.1} parent=23 // pred_check
          %p133 = pneg %p53
        $region26: #{tpu_custom_call.1} parent=23 // pred_check_branch
          %135 = sbr.rel (%p133) target = $region28
        $region27: #{tpu_custom_call.1} parent=23 // pred_region
          %136 = dma.done %s129, 128
        $region28: #{tpu_custom_call.1} parent=23 // pred_fallthru
          _
        %s137 = sand.u32 %s40, 1
        %s138 = scalar_lea.sflag [#allocation3], %s137
        %s139 = sand.u32 %s40, 1
        %s140 = smul.addr %s139, 8
        %s141 = scalar_lea.vmem [#allocation2], %s140
        %p142 = pneg %p53
        %p143 = pneg %p50
        %p144 = pneg %p81
        %p145 = pneg %p78
        %s146 = sand.u32 %s68, 1
        %s147 = scalar_lea.sflag [#allocation4], %s146
        %s148 = sand.u32 %s68, 1
        %s149 = smul.addr %s148, 4
        %s150 = scalar_lea.vmem [#allocation5], %s149
        %s151 = smul.u32 2, %s23
        %s152 = smul.u32 2, %s23
        %v153 = vld [vmem:[%s132] sm:$0xff]
        %v155 = vcombine.high %v153, %v153
        %vm157 = vcmask 1043456
        %v158 = vsel %vm157, %v153, 0.0
        %v159 = vrot.slane %v158, 4
        %v160 = vadd.f32 %v158, %v159
        %v161 = vrot.slane %v160, 2
        %v162 = vadd.f32 %v160, %v161
        %v163 = vrot.slane %v162, 1
        %v164 = vadd.f32 %v162, %v163
        %v165 = vsel %vm157, %v155, 0.0
        %v166 = vrot.slane %v165, 4
        %v167 = vadd.f32 %v165, %v166
        %v168 = vrot.slane %v167, 2
        %v169 = vadd.f32 %v167, %v168
        %v170 = vrot.slane %v169, 1
        %v171 = vadd.f32 %v169, %v170
        %v172 = vmul.f32 %v164, 0.25
        %v173 = vmul.f32 %v171, 0.25
        %v174 = vsel %vm157, %v153, -inf
        %v175 = vrot.slane %v174, 4
        %v176 = vmax.f32 %v174, %v175
        %v177 = vrot.slane %v176, 2
        %v178 = vmax.f32 %v176, %v177
        %v179 = vrot.slane %v178, 1
        %v180 = vmax.f32 %v178, %v179
        %v181 = vsel %vm157, %v155, -inf
        %v182 = vrot.slane %v181, 4
        %v183 = vmax.f32 %v181, %v182
        %v184 = vrot.slane %v183, 2
        %v185 = vmax.f32 %v183, %v184
        %v186 = vrot.slane %v185, 1
        %v187 = vmax.f32 %v185, %v186
        %vm188 = vcmask 1040384
        %v189 = vsel %vm188, %v172, %v180
        %v190 = vsel %vm188, %v173, %v187
        %v193 = vcombine.low %v189, %v190
        %v195 = vunpack.c.l.s4 1983009808
        %v196 = vunpack.c.0.s8 %v195
        %v197 = vlaneseq
        %v198 = vshrl.u32 %v197, 7
        %v199 = vsub.s32 %v196, %v198
        %v200 = vrot.slane %v193, %v199
        %202 = vst [vmem:[%s150] sm:$0xf] %v200
        %s203 = sand.u32 %s68, 1
        %s204 = scalar_lea.sflag [#allocation4], %s203
        %s205 = sand.u32 %s68, 1
        %s206 = smul.addr %s205, 4
        %s207 = scalar_lea.vmem [#allocation5], %s206
        // Predicated region
        $region29: #{tpu_custom_call.1} parent=23 // pred_check
          %p208 = pneg %p78
        $region30: #{tpu_custom_call.1} parent=23 // pred_check_branch
          %210 = sbr.rel (%p208) target = $region32
        $region31: #{tpu_custom_call.1} parent=23 // pred_region
          %s211 = smul.u32 2, %s23
          %s213 = ssub.s32 64, 64
          %214 = vsyncadd %s204, %s213
          %s215 = smul.addr %s22, 2
          %s216 = sadd.s32 %s211, %s215
          %s217 = smul.addr %s216, 32
          %s218 = scalar_lea.hbm %s1, %s217
          %s220 = sshll.u32 %s207, 4
          %s221 = int_to_ptr.vmem [resolvable:$true] %s220
          %223 = dma.vmem_to_hbm [thread:$0]  %s221, 64, %s218, %s204
        $region32: #{tpu_custom_call.1} parent=23 // pred_fallthru
          _
      $region24: #{tpu_custom_call.1} parent=5 // pred_fallthru
        _
      %p224 = scmp.le.s32.totalorder 2, %s13
      // Predicated region
      $region33: #{tpu_custom_call.1} parent=5 // pred_check
        %p225 = pneg %p224
      $region34: #{tpu_custom_call.1} parent=5 // pred_check_branch
        %227 = sbr.rel (%p225) target = $region36
      $region35: #{tpu_custom_call.1} parent=5 // pred_region
        %s228 = ssub.s32 %s13, 2
        // Predicated region
        $region37: #{tpu_custom_call.1} parent=35 // pred_check
          %p229 = pneg %p84
        $region38: #{tpu_custom_call.1} parent=35 // pred_check_branch
          %231 = sbr.rel (%p229) target = $region40
        $region39: #{tpu_custom_call.1} parent=35 // pred_region
          %s232 = sand.u32 %s69, 1
          %s233 = scalar_lea.sflag [#allocation4], %s232
          %s234 = sand.u32 %s69, 1
          %s235 = smul.addr %s234, 4
          %s236 = scalar_lea.vmem [#allocation5], %s235
          %237 = dma.done %s233, 64
        $region40: #{tpu_custom_call.1} parent=35 // pred_fallthru
          _
      $region36: #{tpu_custom_call.1} parent=5 // pred_fallthru
        _
    $region6: #{tpu_custom_call.1} parent=1 // loop_footer
      %s17 = sadd.s32 1, %s13
    $region7: #{tpu_custom_call.1} parent=1 // loop_footer_branch
      %12 = sbr.rel target = $region3
    $region8: #{tpu_custom_call.1} parent=1 // loop_exit
      _
    %238 = vsyncpa [#allocation3], 1
    %s239 = scalar_lea.sflag [#allocation3], 1
    %240 = vsyncpa %s239, 1
    %241 = vsyncpa [#allocation4], 1
    %s242 = scalar_lea.sflag [#allocation4], 1
    %243 = vsyncpa %s242, 1

</llo_original>
